<compile_context>
chip_gen: v6e
topology: v6e:2x2x1
jax: 0.10.0
libtpu: 0.0.40
codegen_flags: <defaults>
</compile_context>

<pallas_src>
import functools
import math

import jax
import jax.numpy as jnp
from jax.experimental import pallas as pl
from jax.experimental.pallas import tpu as pltpu


# ----------------------------------------------------------------------------
# Tiling helpers
# ----------------------------------------------------------------------------

def _row_tile(m, prefer_split, max_tile=256):
    """Largest multiple-of-8 divisor of m (<= max_tile).  With prefer_split,
    also require >= 2 row blocks when m >= 16 so kernels whose only parallel
    grid axis is the row axis still use both v7x TensorCores."""
    cap = min(m, max_tile)
    if prefer_split and m >= 16:
        cap = min(cap, m // 2)
    t = (cap // 8) * 8
    while t >= 8:
        if m % t == 0:
            return t
        t -= 8
    return m


def _col_tile(n, max_tile=768):
    """Largest multiple-of-128 divisor of n (<= max_tile); lane-dense output
    tiles (wide unmasked vector stores)."""
    cap = min(n, max_tile)
    t = (cap // 128) * 128
    while t >= 128:
        if n % t == 0:
            return t
        t -= 128
    return n


# ----------------------------------------------------------------------------
# Fused matmul + bias (+ optional GELU).  Single-K-tile variant: the whole
# contraction dim stays resident (K in {768, 3072} at these row tiles is a
# few MB), so no accumulator scratch / k-axis plumbing is needed.
# ----------------------------------------------------------------------------

def _linear_kernel(x_ref, w_ref, b_ref, o_ref, *, activation):
    y = jnp.dot(x_ref[...], w_ref[...], preferred_element_type=jnp.float32)
    y = y + b_ref[...]                               # f32 epilogue
    if activation == "gelu":
        # TODO(synk): HF RoBERTa uses exact erf-GELU; tanh approximation used
        # here for guaranteed Mosaic lowering.
        y = jax.nn.gelu(y, approximate=True)
    o_ref[...] = y.astype(o_ref.dtype)


def pallas_linear(x, w, b, activation=None, out_dtype=jnp.bfloat16):
    """y = act(x @ w + b); x:(M,K) bf16, w:(K,N) bf16 (pre-cast), b:(1,N) f32.

    Grid (M/tm, N/tn), both axes 'parallel' (megacore).  bf16 MXU inputs,
    f32 accumulate + epilogue, bf16 output feeds the next matmul directly."""
    M, K = x.shape
    N = w.shape[1]
    tm = _row_tile(M, prefer_split=False)     # the N axis already parallelizes
    tn = _col_tile(N)
    # Guard the no-K-tiling assumption against the v5e 16 MiB scoped default.
    footprint = 2 * (tm * K + K * tn + tm * tn) * 2 + tm * tn * 4
    assert footprint < 12 * 1024 * 1024, \
        "pallas_linear: single-K-tile footprint too large; add K tiling"

    kern = functools.partial(_linear_kernel, activation=activation)
    return pl.pallas_call(
        kern,
        out_shape=jax.ShapeDtypeStruct((M, N), out_dtype),
        grid=(M // tm, N // tn),
        in_specs=[
            pl.BlockSpec((tm, K), lambda i, j: (i, 0)),
            pl.BlockSpec((K, tn), lambda i, j: (0, j)),
            pl.BlockSpec((1, tn), lambda i, j: (0, j)),
        ],
        out_specs=pl.BlockSpec((tm, tn), lambda i, j: (i, j)),
        compiler_params=pltpu.CompilerParams(
            dimension_semantics=("parallel", "parallel")),
    )(x, w, b)


# ----------------------------------------------------------------------------
# Fused matmul + bias + residual add + LayerNorm (used for the FFN W2 path).
# Produces the full output row per step so the LayerNorm statistics live in
# the matmul epilogue — no separate add+LN kernel, no extra HBM round trip.
# ----------------------------------------------------------------------------

def _linear_add_ln_kernel(x_ref, w_ref, b_ref, r_ref, g_ref, be_ref, o_ref,
                          *, eps):
    y = jnp.dot(x_ref[...], w_ref[...], preferred_element_type=jnp.float32)
    y = y + b_ref[...] + r_ref[...].astype(jnp.float32)      # residual in f32
    mu = jnp.mean(y, axis=-1, keepdims=True)
    var = jnp.mean(jnp.square(y - mu), axis=-1, keepdims=True)
    y = (y - mu) * jax.lax.rsqrt(var + eps) * g_ref[...] + be_ref[...]
    o_ref[...] = y.astype(o_ref.dtype)


def pallas_linear_add_ln(x, w, b, residual, gamma, beta, eps=1e-5,
                         out_dtype=jnp.bfloat16):
    """LayerNorm(x @ w + b + residual); x:(M,K) bf16, w:(K,N) bf16.

    Grid (M/tm,): rows split (>=2 blocks) so both v7x cores get work; the
    weight uses a constant index_map so it is DMA'd once (revisit skip)."""
    M, K = x.shape
    N = w.shape[1]
    tm = _row_tile(M, prefer_split=True)
    footprint = 2 * (tm * K + K * N + 2 * tm * N) * 2
    assert footprint < 14 * 1024 * 1024, \
        "pallas_linear_add_ln: footprint too large; add K tiling"

    return pl.pallas_call(
        functools.partial(_linear_add_ln_kernel, eps=eps),
        out_shape=jax.ShapeDtypeStruct((M, N), out_dtype),
        grid=(M // tm,),
        in_specs=[
            pl.BlockSpec((tm, K), lambda i: (i, 0)),   # activations
            pl.BlockSpec((K, N), lambda i: (0, 0)),    # weight (loaded once)
            pl.BlockSpec((1, N), lambda i: (0, 0)),    # bias
            pl.BlockSpec((tm, N), lambda i: (i, 0)),   # residual stream
            pl.BlockSpec((1, N), lambda i: (0, 0)),    # LN gamma
            pl.BlockSpec((1, N), lambda i: (0, 0)),    # LN beta
        ],
        out_specs=pl.BlockSpec((tm, N), lambda i: (i, 0)),
        compiler_params=pltpu.CompilerParams(
            dimension_semantics=("parallel",)),
    )(x, w, b, residual, gamma, beta)


# ----------------------------------------------------------------------------
# Standalone LayerNorm (embeddings only), bf16 output, f32 statistics.
# ----------------------------------------------------------------------------

def _ln_kernel(x_ref, g_ref, b_ref, o_ref, *, eps):
    xv = x_ref[...]
    mu = jnp.mean(xv, axis=-1, keepdims=True)
    var = jnp.mean(jnp.square(xv - mu), axis=-1, keepdims=True)
    y = (xv - mu) * jax.lax.rsqrt(var + eps) * g_ref[...] + b_ref[...]
    o_ref[...] = y.astype(o_ref.dtype)


def pallas_layernorm(x, gamma, beta, eps=1e-5, out_dtype=jnp.bfloat16):
    M, H = x.shape
    tm = _row_tile(M, prefer_split=True)     # >=2 row blocks -> v7x megacore
    return pl.pallas_call(
        functools.partial(_ln_kernel, eps=eps),
        out_shape=jax.ShapeDtypeStruct((M, H), out_dtype),
        grid=(M // tm,),
        in_specs=[pl.BlockSpec((tm, H), lambda i: (i, 0)),
                  pl.BlockSpec((1, H), lambda i: (0, 0)),
                  pl.BlockSpec((1, H), lambda i: (0, 0))],
        out_specs=pl.BlockSpec((tm, H), lambda i: (i, 0)),
        compiler_params=pltpu.CompilerParams(
            dimension_semantics=("parallel",)),
    )(x, gamma, beta)


# ----------------------------------------------------------------------------
# Fused attention block: QKV projection + multi-head attention + output
# projection + residual add + LayerNorm, one grid step per batch row.
# The QKV slab and per-head context stay in VMEM (never written to HBM).
# ----------------------------------------------------------------------------

def _attention_block_kernel(x_ref, wqkv_ref, bqkv_ref, wo_ref, bo_ref,
                            g_ref, b_ref, bias_ref, o_ref, ctx_ref, *,
                            n_heads, head_dim, hidden, eps):
    x16 = x_ref[...]                                          # (S, H) bf16
    # Fused Q/K/V projection: one (S,H) @ (H,3H) MXU matmul, f32 accumulate.
    qkv = jnp.dot(x16, wqkv_ref[...], preferred_element_type=jnp.float32)
    qkv = (qkv + bqkv_ref[...]).astype(jnp.bfloat16)          # (S, 3H)
    bias = bias_ref[0]                                        # (1, S) additive
    scale = 1.0 / math.sqrt(head_dim)
    # TODO(synk): head_dim=64 < the 128-lane width, so per-head slices still
    # relayout in-register; acceptable at S=8 since nothing round-trips HBM.
    for h in range(n_heads):                                  # static unroll
        lo = h * head_dim
        hi = lo + head_dim
        q = qkv[:, lo:hi]                                     # (S, hd) bf16
        k = qkv[:, hidden + lo:hidden + hi]
        v = qkv[:, 2 * hidden + lo:2 * hidden + hi]
        # QK^T without materializing k.T: contract the last dims.
        s = jax.lax.dot_general(q, k, (((1,), (1,)), ((), ())),
                                preferred_element_type=jnp.float32)
        s = s * scale + bias                                  # (S, S) f32
        m = jnp.max(s, axis=-1, keepdims=True)
        p = jnp.exp(s - m)
        p = p / jnp.sum(p, axis=-1, keepdims=True)            # exact softmax
        # Write each head's context straight into its column range: no
        # `outs` list, no concatenate, no live f32 tiles across heads.
        ctx_ref[:, lo:hi] = jnp.dot(p.astype(jnp.bfloat16), v,
                                    preferred_element_type=jnp.float32)
    # Output projection + residual add + LayerNorm, all in VMEM.
    y = jnp.dot(ctx_ref[...].astype(jnp.bfloat16), wo_ref[...],
                preferred_element_type=jnp.float32)
    y = y + bo_ref[...] + x16.astype(jnp.float32)
    mu = jnp.mean(y, axis=-1, keepdims=True)
    var = jnp.mean(jnp.square(y - mu), axis=-1, keepdims=True)
    y = (y - mu) * jax.lax.rsqrt(var + eps) * g_ref[...] + b_ref[...]
    o_ref[...] = y.astype(o_ref.dtype)


def pallas_attention_block(x, layer, bias, batch, cfg, eps=1e-5):
    """x: (B*S, H) bf16 residual stream; bias: (B, 1, S) additive mask.
    Returns LayerNorm(x + Wo·Attention(QKV(x)) + bo) as (B*S, H) bf16."""
    M, H = x.shape
    S = M // batch
    nH = cfg["heads"]
    hd = H // nH
    kern = functools.partial(_attention_block_kernel, n_heads=nH,
                             head_dim=hd, hidden=H, eps=eps)
    return pl.pallas_call(
        kern,
        out_shape=jax.ShapeDtypeStruct((M, H), jnp.bfloat16),
        grid=(batch,),                                        # 1 step / batch
        in_specs=[
            pl.BlockSpec((S, H), lambda b: (b, 0)),           # x (= residual)
            pl.BlockSpec((H, 3 * H), lambda b: (0, 0)),       # fused QKV weight
            pl.BlockSpec((1, 3 * H), lambda b: (0, 0)),       # fused QKV bias
            pl.BlockSpec((H, H), lambda b: (0, 0)),           # output proj W
            pl.BlockSpec((1, H), lambda b: (0, 0)),           # output proj b
            pl.BlockSpec((1, H), lambda b: (0, 0)),           # LN gamma
            pl.BlockSpec((1, H), lambda b: (0, 0)),           # LN beta
            pl.BlockSpec((1, 1, S), lambda b: (b, 0, 0)),     # additive mask
        ],
        out_specs=pl.BlockSpec((S, H), lambda b: (b, 0)),
        scratch_shapes=[pltpu.VMEM((S, H), jnp.float32)],     # merged context
        compiler_params=pltpu.CompilerParams(
            dimension_semantics=("parallel",)),
    )(x, layer["wqkv"], layer["bqkv"], layer["wo"], layer["bo"],
      layer["ln1_g"], layer["ln1_b"], bias)


# ----------------------------------------------------------------------------
# Synthetic RoBERTa parameters (matmul weights stored pre-cast to bf16)
# ----------------------------------------------------------------------------

CFG = dict(vocab=100, hidden=768, layers=2, heads=12, inter=3072,
           max_pos=32, pad_offset=2)


def init_params(key, cfg):
    H, I = cfg["hidden"], cfg["inter"]
    std = 0.02

    def nrm(k, shape, dtype=jnp.float32):
        return (std * jax.random.normal(k, shape, dtype=jnp.float32)).astype(dtype)

    keys = iter(jax.random.split(key, 8 + 8 * cfg["layers"]))
    params = {
        "word_emb": nrm(next(keys), (cfg["vocab"], H)),
        "pos_emb": nrm(next(keys), (cfg["max_pos"], H)),
        "type_emb": nrm(next(keys), (1, H)),
        "emb_ln_g": jnp.ones((1, H), jnp.float32),
        "emb_ln_b": jnp.zeros((1, H), jnp.float32),
        "head_w": nrm(next(keys), (H, 1)),
        "head_b": jnp.zeros((1,), jnp.float32),
        "layers": [],
    }
    for _ in range(cfg["layers"]):
        layer = {
            # Matmul weights pre-cast to bf16 ONCE (MXU input dtype); biases
            # and LayerNorm params stay f32 for the f32 epilogues.
            "wqkv": nrm(next(keys), (H, 3 * H), jnp.bfloat16),  # fused Q|K|V
            "bqkv": jnp.zeros((1, 3 * H), jnp.float32),
            "wo": nrm(next(keys), (H, H), jnp.bfloat16),
            "bo": jnp.zeros((1, H), jnp.float32),
            "ln1_g": jnp.ones((1, H), jnp.float32),
            "ln1_b": jnp.zeros((1, H), jnp.float32),
            "w1": nrm(next(keys), (H, I), jnp.bfloat16),
            "b1": jnp.zeros((1, I), jnp.float32),
            "w2": nrm(next(keys), (I, H), jnp.bfloat16),
            "b2": jnp.zeros((1, H), jnp.float32),
            "ln2_g": jnp.ones((1, H), jnp.float32),
            "ln2_b": jnp.zeros((1, H), jnp.float32),
        }
        params["layers"].append(layer)
    return params


# ----------------------------------------------------------------------------
# Forward pass (RoBERTaBase.forward)
# ----------------------------------------------------------------------------

def roberta_base_forward(params, ids, mask, cfg):
    B, S = ids.shape
    H = cfg["hidden"]

    # --- embeddings (table gathers stay in plain JAX) ---
    assert S + cfg["pad_offset"] <= cfg["max_pos"]
    pos_ids = jnp.arange(S, dtype=jnp.int32) + cfg["pad_offset"]
    x = (params["word_emb"][ids]
         + params["pos_emb"][pos_ids][None, :, :]
         + params["type_emb"][0][None, None, :])
    x = x.reshape(B * S, H).astype(jnp.float32)
    # Embedding LayerNorm emits bf16 so downstream matmuls consume it directly.
    x = pallas_layernorm(x, params["emb_ln_g"], params["emb_ln_b"])

    # Additive attention-mask bias: 0 where attended, -1e9 where padded.
    bias = ((1.0 - mask.astype(jnp.float32)) * -1e9).reshape(B, 1, S)

    for layer in params["layers"]:
        # 3 pallas_calls per encoder layer:
        # 1) QKV proj + attention + output proj + residual + LN (one kernel)
        x = pallas_attention_block(x, layer, bias, B, cfg)
        # 2) W1 matmul with fused GELU (bf16 out)
        inter = pallas_linear(x, layer["w1"], layer["b1"], activation="gelu")
        # 3) W2 matmul with residual-add + LayerNorm fused into the epilogue
        x = pallas_linear_add_ln(inter, layer["w2"], layer["b2"],
                                 x, layer["ln2_g"], layer["ln2_b"])

    # last_hidden_state[:, 0, :]  -> (B, H)
    cls = x.reshape(B, S, H)[:, 0, :].astype(jnp.float32)
    # Dropout(p=0.2) is identity at inference time.
    # Final 768->1 head + sigmoid in plain JAX: an N=1 matmul would waste the
    # MXU and a kernel launch.
    logits = jax.nn.sigmoid(cls @ params["head_w"] + params["head_b"])  # (B, 1)
    return logits[:, 0]                                                 # squeeze


# ----------------------------------------------------------------------------
# Main
# ----------------------------------------------------------------------------

if __name__ == "__main__":
    B, S = 2, 8
    key = jax.random.PRNGKey(0)
    k_param, k_ids = jax.random.split(key)

    params = init_params(k_param, CFG)
    ids = jax.random.randint(k_ids, (B, S), 0, CFG["vocab"], dtype=jnp.int32)
    mask = jnp.ones((B, S), dtype=jnp.int32)

    out = roberta_base_forward(params, ids, mask, CFG)
    out = jax.block_until_ready(out)

    assert out.shape == (B,), out.shape
    assert bool(jnp.all(jnp.isfinite(out)))
    assert bool(jnp.all((out >= 0.0) & (out <= 1.0)))
    print("KERNEL_OK")
</pallas_src>

<mosaic_0001>
module attributes {stable_mosaic.version = 11 : i64} {
  func.func @_ln_kernel(%arg0: i32, %arg1: memref<8x768xf32, #tpu.memory_space<vmem>>, %arg2: memref<1x768xf32, #tpu.memory_space<vmem>>, %arg3: memref<1x768xf32, #tpu.memory_space<vmem>>, %arg4: memref<8x768xbf16, #tpu.memory_space<vmem>>) attributes {dimension_semantics = [#tpu.dimension_semantics<parallel>], iteration_bounds = array<i64: 2>, scalar_prefetch = 0 : i64, scratch_operands = 0 : i64, tpu.core_type = #tpu.core_type<tc>, window_params = [{transform_indices = @transform_0, window_bounds = array<i64: 8, 768>}, {pipeline_mode = #tpu.pipeline_mode<synchronous>, transform_indices = @transform_1, window_bounds = array<i64: 1, 768>}, {pipeline_mode = #tpu.pipeline_mode<synchronous>, transform_indices = @transform_2, window_bounds = array<i64: 1, 768>}, {transform_indices = @transform_3, window_bounds = array<i64: 8, 768>}]} {
    %c0 = arith.constant 0 : index
    %c0_0 = arith.constant 0 : index
    %0 = vector.load %arg1[%c0, %c0_0] : memref<8x768xf32, #tpu.memory_space<vmem>>, vector<8x768xf32>
    %cst = arith.constant dense<0.000000e+00> : vector<8xf32>
    %1 = vector.multi_reduction <add>, %0, %cst [1] : vector<8x768xf32> to vector<8xf32>
    %2 = vector.shape_cast %1 : vector<8xf32> to vector<8x1xf32>
    %cst_1 = arith.constant 7.680000e+02 : f32
    %3 = vector.broadcast %cst_1 : f32 to vector<8x1xf32>
    %4 = arith.divf %2, %3 : vector<8x1xf32>
    %5 = vector.broadcast %4 : vector<8x1xf32> to vector<8x768xf32>
    %6 = arith.subf %0, %5 : vector<8x768xf32>
    %7 = arith.mulf %6, %6 : vector<8x768xf32>
    %cst_2 = arith.constant dense<0.000000e+00> : vector<8xf32>
    %8 = vector.multi_reduction <add>, %7, %cst_2 [1] : vector<8x768xf32> to vector<8xf32>
    %9 = vector.shape_cast %8 : vector<8xf32> to vector<8x1xf32>
    %cst_3 = arith.constant 7.680000e+02 : f32
    %10 = vector.broadcast %cst_3 : f32 to vector<8x1xf32>
    %11 = arith.divf %9, %10 : vector<8x1xf32>
    %12 = vector.broadcast %4 : vector<8x1xf32> to vector<8x768xf32>
    %13 = arith.subf %0, %12 : vector<8x768xf32>
    %cst_4 = arith.constant 9.99999974E-6 : f32
    %14 = vector.broadcast %cst_4 : f32 to vector<8x1xf32>
    %15 = arith.addf %11, %14 : vector<8x1xf32>
    %16 = math.rsqrt %15 : vector<8x1xf32>
    %17 = vector.broadcast %16 : vector<8x1xf32> to vector<8x768xf32>
    %18 = arith.mulf %13, %17 : vector<8x768xf32>
    %c0_5 = arith.constant 0 : index
    %c0_6 = arith.constant 0 : index
    %19 = vector.load %arg2[%c0_5, %c0_6] : memref<1x768xf32, #tpu.memory_space<vmem>>, vector<1x768xf32>
    %20 = vector.broadcast %19 : vector<1x768xf32> to vector<8x768xf32>
    %21 = arith.mulf %18, %20 : vector<8x768xf32>
    %c0_7 = arith.constant 0 : index
    %c0_8 = arith.constant 0 : index
    %22 = vector.load %arg3[%c0_7, %c0_8] : memref<1x768xf32, #tpu.memory_space<vmem>>, vector<1x768xf32>
    %23 = vector.broadcast %22 : vector<1x768xf32> to vector<8x768xf32>
    %24 = arith.addf %21, %23 : vector<8x768xf32>
    %25 = arith.truncf %24 : vector<8x768xf32> to vector<8x768xbf16>
    %c0_9 = arith.constant 0 : index
    %c0_10 = arith.constant 0 : index
    %26 = vector.load %arg4[%c0_9, %c0_10] : memref<8x768xbf16, #tpu.memory_space<vmem>>, vector<8x768xbf16>
    tpu.vector_store %arg4[%c0_9, %c0_10], %25 {strides = array<i32>} : memref<8x768xbf16, #tpu.memory_space<vmem>>, vector<8x768xbf16>,
    return
  }
  func.func @transform_0(%arg0: i32) -> (i32, i32) {
    %c0_i32 = arith.constant 0 : i32
    %c0_i32_0 = arith.constant 0 : i32
    return %arg0, %c0_i32 : i32, i32
  }
  func.func @transform_1(%arg0: i32) -> (i32, i32) {
    %c0_i32 = arith.constant 0 : i32
    %c0_i32_0 = arith.constant 0 : i32
    %c0_i32_1 = arith.constant 0 : i32
    return %c0_i32, %c0_i32_0 : i32, i32
  }
  func.func @transform_2(%arg0: i32) -> (i32, i32) {
    %c0_i32 = arith.constant 0 : i32
    %c0_i32_0 = arith.constant 0 : i32
    %c0_i32_1 = arith.constant 0 : i32
    return %c0_i32, %c0_i32_0 : i32, i32
  }
  func.func @transform_3(%arg0: i32) -> (i32, i32) {
    %c0_i32 = arith.constant 0 : i32
    %c0_i32_0 = arith.constant 0 : i32
    return %arg0, %c0_i32 : i32, i32
  }
}

</mosaic_0001>

<llo_original>
// kernel: tpu_custom_call.1
$region0: #{tpu_custom_call.1}
  #allocation0 [shape = 'u32[]', space=smem, size = 0x4, offset = 0x4, fixed_abs, tag = 'smem constant byte address 0x4 - core index']
  #allocation1 [shape = 'u32[144,128]{1,0:T(1,128)}', space=vmem, size = 0x12000, scoped, tag = 'internal scratch']
  %s0 = inlined_call_operand.hbm [shape: f32[16,768], index: 0, kind: input, shape index: {}]
  %s1 = inlined_call_operand.hbm [shape: f32[1,768], index: 1, kind: input, shape index: {}]
  %s2 = inlined_call_operand.hbm [shape: f32[1,768], index: 2, kind: input, shape index: {}]
  %s3 = inlined_call_operand.hbm [shape: bf16[16,768], index: 3, kind: output, shape index: {}]
  %s4 = sld [smem:[#allocation0]]
  $region57: #{tpu_custom_call.1} parent=0
    _
  %s6 = ssub.s32 1, %s4
  %s7 = scalar_select 0, %s6, %s4
  $region1: #{tpu_custom_call.1} parent=0
    #allocation2 [shape = 'u8[49152]{0}', space=vmem, size = 0xc000, scoped, tag = 'input window, operand 0']
    #allocation3 [shape = 's32[2]{0}', space=sflag, size = 0x8, scoped, tag = 'scoped memory for tpu_custom_call.1']
    #allocation4 [shape = 's32[2]{0}', space=sflag, size = 0x8, scoped, tag = 'scoped memory for tpu_custom_call.1']
    #allocation5 [shape = 'u8[3072]{0}', space=vmem, size = 0xc00, scoped, tag = 'input window, operand 1, single buffered']
    #allocation6 [shape = 's32[1]{0}', space=sflag, size = 0x4, scoped, tag = 'scoped memory for tpu_custom_call.1']
    #allocation7 [shape = 'u8[3072]{0}', space=vmem, size = 0xc00, scoped, tag = 'input window, operand 2, single buffered']
    #allocation8 [shape = 'u8[24576]{0}', space=vmem, size = 0x6000, scoped, tag = 'output window, operand 0']
    %8 = vsyncpa [#allocation3], 0
    %s9 = scalar_lea.sflag [#allocation3], 1
    %10 = vsyncpa %s9, 0
    %11 = vsyncpa [#allocation6], 0
    %12 = vsyncpa [#allocation4], 0
    %s13 = scalar_lea.sflag [#allocation4], 1
    %14 = vsyncpa %s13, 0
    loop: start=0, step=1, limit=4
    $region2: #{tpu_custom_call.1} parent=1 // loop_pre_header
      _
    $region3: #{tpu_custom_call.1} parent=1 // loop_header
      %s16 = sphi 0, %s20
      %p17 = scmp.ge.s32.totalorder %s16, 4
      %s26 = sphi 0, %s28
      %s29 = sphi 0, %s26
      %s30 = sphi 0, %s29
      %s46 = sphi 0, %s30
      %s50 = sphi 0, %s50
      %s52 = sphi 0, %s50
      %s53 = sphi 0, %s52
      %s67 = sphi 0, %s53
      %s71 = sphi 0, %s71
      %s73 = sphi 0, %s71
      %s74 = sphi 0, %s73
      %s88 = sphi 0, %s74
      %s94 = sphi 0, %s96
      %s97 = sphi 0, %s94
      %s98 = sphi 0, %s97
      %s114 = sphi 0, %s98
    $region4: #{tpu_custom_call.1} parent=1 // loop_header_branch
      %19 = sbr.rel (%p17) target = $region8
    $region5: #{tpu_custom_call.1} parent=1 // loop_body
      %s21 = ssub.s32 %s16, 1
      %s22 = ssub.s32 %s16, 2
      %s23 = sadd.s32 %s16, 1
      %s24 = ssub.s32 %s16, %s23
      %p25 = scmp.eq.s32.totalorder %s24, 0
      %s27 = sadd.s32 %s26, 1
      %s28 = scalar_select %p25, %s26, %s27
      %p31 = pneg %p25
      %p32 = scmp.eq.s32.totalorder %s16, 1
      %p33 = por %p31, %p32
      %p34 = scmp.ne.s32.totalorder %s26, %s29
      %p35 = scmp.eq.s32.totalorder %s16, 0
      %p36 = por %p34, %p35
      %p37 = scmp.ne.s32.totalorder %s26, %s29
      %p38 = scmp.eq.s32.totalorder %s21, 1
      %p39 = por %p37, %p38
      %p40 = scmp.ne.s32.totalorder %s29, %s30
      %p41 = scmp.eq.s32.totalorder %s21, 0
      %p42 = por %p40, %p41
      %p43 = scmp.ne.s32.totalorder %s29, %s30
      %p44 = scmp.eq.s32.totalorder %s22, 1
      %p45 = por %p43, %p44
      %p47 = scmp.ne.s32.totalorder %s30, %s46
      %p48 = scmp.eq.s32.totalorder %s22, 0
      %p49 = por %p47, %p48
      %s51 = sadd.s32 %s50, 1
      %p54 = scmp.eq.s32.totalorder %s16, 1
      %p55 = scmp.ne.s32.totalorder %s50, %s52
      %p56 = scmp.eq.s32.totalorder %s16, 0
      %p57 = por %p55, %p56
      %p58 = scmp.ne.s32.totalorder %s50, %s52
      %p59 = scmp.eq.s32.totalorder %s21, 1
      %p60 = por %p58, %p59
      %p61 = scmp.ne.s32.totalorder %s52, %s53
      %p62 = scmp.eq.s32.totalorder %s21, 0
      %p63 = por %p61, %p62
      %p64 = scmp.ne.s32.totalorder %s52, %s53
      %p65 = scmp.eq.s32.totalorder %s22, 1
      %p66 = por %p64, %p65
      %p68 = scmp.ne.s32.totalorder %s53, %s67
      %p69 = scmp.eq.s32.totalorder %s22, 0
      %p70 = por %p68, %p69
      %s72 = sadd.s32 %s71, 1
      %p75 = scmp.eq.s32.totalorder %s16, 1
      %p76 = scmp.ne.s32.totalorder %s71, %s73
      %p77 = scmp.eq.s32.totalorder %s16, 0
      %p78 = por %p76, %p77
      %p79 = scmp.ne.s32.totalorder %s71, %s73
      %p80 = scmp.eq.s32.totalorder %s21, 1
      %p81 = por %p79, %p80
      %p82 = scmp.ne.s32.totalorder %s73, %s74
      %p83 = scmp.eq.s32.totalorder %s21, 0
      %p84 = por %p82, %p83
      %p85 = scmp.ne.s32.totalorder %s73, %s74
      %p86 = scmp.eq.s32.totalorder %s22, 1
      %p87 = por %p85, %p86
      %p89 = scmp.ne.s32.totalorder %s74, %s88
      %p90 = scmp.eq.s32.totalorder %s22, 0
      %p91 = por %p89, %p90
      %s92 = ssub.s32 %s16, %s23
      %p93 = scmp.eq.s32.totalorder %s92, 0
      %s95 = sadd.s32 %s94, 1
      %s96 = scalar_select %p93, %s94, %s95
      %p99 = pneg %p93
      %p100 = scmp.eq.s32.totalorder %s16, 1
      %p101 = por %p99, %p100
      %p102 = scmp.ne.s32.totalorder %s94, %s97
      %p103 = scmp.eq.s32.totalorder %s16, 0
      %p104 = por %p102, %p103
      %p105 = scmp.ne.s32.totalorder %s94, %s97
      %p106 = scmp.eq.s32.totalorder %s21, 1
      %p107 = por %p105, %p106
      %p108 = scmp.ne.s32.totalorder %s97, %s98
      %p109 = scmp.eq.s32.totalorder %s21, 0
      %p110 = por %p108, %p109
      %p111 = scmp.ne.s32.totalorder %s97, %s98
      %p112 = scmp.eq.s32.totalorder %s22, 1
      %p113 = por %p111, %p112
      %p115 = scmp.ne.s32.totalorder %s98, %s114
      %p116 = scmp.eq.s32.totalorder %s22, 0
      %p117 = por %p115, %p116
      %p118 = scmp.le.s32.totalorder 1, %s16
      %p119 = scmp.lt.s32.totalorder %s16, 3
      %p120 = pnand %p118, %p119
      %p121 = pneg %p120
      // Predicated region
      $region9: #{tpu_custom_call.1} parent=5 // pred_check
        _
      $region10: #{tpu_custom_call.1} parent=5 // pred_check_branch
        %123 = sbr.rel (%p120) target = $region12
      $region11: #{tpu_custom_call.1} parent=5 // pred_region
        %s124 = ssub.s32 %s16, 1
        // Predicated region
        $region13: #{tpu_custom_call.1} parent=11 // pred_check
          %p125 = pneg %p63
        $region14: #{tpu_custom_call.1} parent=11 // pred_check_branch
          %127 = sbr.rel (%p125) target = $region16
        $region15: #{tpu_custom_call.1} parent=11 // pred_region
          %s129 = ssub.s32 96, 96
          %130 = vsyncadd [#allocation6], %s129
          %s132 = sshll.u32 [#allocation5], 4
          %s133 = int_to_ptr.vmem [resolvable:$true] %s132
          %135 = dma.hbm_to_vmem [thread:$0]  %s1, 96, %s133, [#allocation6]
        $region16: #{tpu_custom_call.1} parent=11 // pred_fallthru
          _
        // Predicated region
        $region17: #{tpu_custom_call.1} parent=11 // pred_check
          %p136 = pneg %p84
        $region18: #{tpu_custom_call.1} parent=11 // pred_check_branch
          %138 = sbr.rel (%p136) target = $region20
        $region19: #{tpu_custom_call.1} parent=11 // pred_region
          %s140 = ssub.s32 96, 96
          %141 = vsyncadd [#allocation6], %s140
          %s143 = sshll.u32 [#allocation7], 4
          %s144 = int_to_ptr.vmem [resolvable:$true] %s143
          %146 = dma.hbm_to_vmem [thread:$0]  %s2, 96, %s144, [#allocation6]
        $region20: #{tpu_custom_call.1} parent=11 // pred_fallthru
          _
      $region12: #{tpu_custom_call.1} parent=5 // pred_fallthru
        _
      %p147 = scmp.lt.s32.totalorder %s16, 2
      // Predicated region
      $region21: #{tpu_custom_call.1} parent=5 // pred_check
        %p148 = pneg %p147
      $region22: #{tpu_custom_call.1} parent=5 // pred_check_branch
        %150 = sbr.rel (%p148) target = $region24
      $region23: #{tpu_custom_call.1} parent=5 // pred_region
        // Predicated region
        $region25: #{tpu_custom_call.1} parent=23 // pred_check
          %p151 = pneg %p36
        $region26: #{tpu_custom_call.1} parent=23 // pred_check_branch
          %153 = sbr.rel (%p151) target = $region28
        $region27: #{tpu_custom_call.1} parent=23 // pred_region
          %s154 = sand.u32 %s26, 1
          %s155 = scalar_lea.sflag [#allocation3], %s154
          %s156 = sand.u32 %s26, 1
          %s157 = smul.addr %s156, 48
          %s158 = scalar_lea.vmem [#allocation2], %s157
          %s160 = ssub.s32 768, 768
          %161 = vsyncadd %s155, %s160
          %s162 = smul.addr %s16, 6
          %s163 = smul.addr %s162, 128
          %s164 = scalar_lea.hbm %s0, %s163
          %s166 = sshll.u32 %s158, 4
          %s167 = int_to_ptr.vmem [resolvable:$true] %s166
          %169 = dma.hbm_to_vmem [thread:$0]  %s164, 768, %s167, %s155
        $region28: #{tpu_custom_call.1} parent=23 // pred_fallthru
          _
      $region24: #{tpu_custom_call.1} parent=5 // pred_fallthru
        _
      %p170 = scmp.le.s32.totalorder 1, %s16
      %p171 = scmp.lt.s32.totalorder %s16, 3
      %p172 = pnand %p170, %p171
      %p173 = pneg %p172
      // Predicated region
      $region29: #{tpu_custom_call.1} parent=5 // pred_check
        _
      $region30: #{tpu_custom_call.1} parent=5 // pred_check_branch
        %175 = sbr.rel (%p172) target = $region32
      $region31: #{tpu_custom_call.1} parent=5 // pred_region
        %s176 = ssub.s32 %s16, 1
        %s177 = sand.u32 %s29, 1
        %s178 = scalar_lea.sflag [#allocation3], %s177
        %s179 = sand.u32 %s29, 1
        %s180 = smul.addr %s179, 48
        %s181 = scalar_lea.vmem [#allocation2], %s180
        // Predicated region
        $region33: #{tpu_custom_call.1} parent=31 // pred_check
          %p182 = pneg %p42
        $region34: #{tpu_custom_call.1} parent=31 // pred_check_branch
          %184 = sbr.rel (%p182) target = $region36
        $region35: #{tpu_custom_call.1} parent=31 // pred_region
          %185 = dma.done %s178, 768
        $region36: #{tpu_custom_call.1} parent=31 // pred_fallthru
          _
        // Predicated region
        $region37: #{tpu_custom_call.1} parent=31 // pred_check
          %p186 = pneg %p63
        $region38: #{tpu_custom_call.1} parent=31 // pred_check_branch
          %188 = sbr.rel (%p186) target = $region40
        $region39: #{tpu_custom_call.1} parent=31 // pred_region
          %189 = dma.done [#allocation6], 96
        $region40: #{tpu_custom_call.1} parent=31 // pred_fallthru
          _
        // Predicated region
        $region41: #{tpu_custom_call.1} parent=31 // pred_check
          %p190 = pneg %p84
        $region42: #{tpu_custom_call.1} parent=31 // pred_check_branch
          %192 = sbr.rel (%p190) target = $region44
        $region43: #{tpu_custom_call.1} parent=31 // pred_region
          %193 = dma.done [#allocation6], 96
        $region44: #{tpu_custom_call.1} parent=31 // pred_fallthru
          _
        %s194 = sand.u32 %s29, 1
        %s195 = scalar_lea.sflag [#allocation3], %s194
        %s196 = sand.u32 %s29, 1
        %s197 = smul.addr %s196, 48
        %s198 = scalar_lea.vmem [#allocation2], %s197
        %p199 = pneg %p42
        %p200 = pneg %p39
        %p201 = pneg %p63
        %p202 = pneg %p60
        %p203 = pneg %p84
        %p204 = pneg %p81
        %p205 = pneg %p110
        %p206 = pneg %p107
        %s207 = sand.u32 %s97, 1
        %s208 = scalar_lea.sflag [#allocation4], %s207
        %s209 = sand.u32 %s97, 1
        %s210 = smul.addr %s209, 24
        %s211 = scalar_lea.vmem [#allocation8], %s210
        %v212 = vld [vmem:[%s181] sm:$0xff]
        %v213 = vld [vmem:[%s181 + $0x8] sm:$0xff]
        %v214 = vld [vmem:[%s181 + $0x10] sm:$0xff]
        %v215 = vld [vmem:[%s181 + $0x18] sm:$0xff]
        %v216 = vld [vmem:[%s181 + $0x20] sm:$0xff]
        %v217 = vld [vmem:[%s181 + $0x28] sm:$0xff]
        %v218 = vadd.f32 %v212, %v213
        %v219 = vadd.f32 %v218, %v214
        %v220 = vadd.f32 %v219, %v215
        %v221 = vadd.f32 %v220, %v216
        %v222 = vadd.f32 %v221, %v217
        %223 = vadd.xlane.f32.xlu0 %v222
        %v224 = vpop.xlane.xlu0 %223
        %v225 = vrcp.pop 768.0
        %v226 = vmul.f32 %v224, %v225
        %v227 = vsub.f32 %v212, %v226
        %v228 = vsub.f32 %v213, %v226
        %v229 = vsub.f32 %v214, %v226
        %v230 = vsub.f32 %v215, %v226
        %v231 = vsub.f32 %v216, %v226
        %v232 = vsub.f32 %v217, %v226
        %v233 = vmul.f32 %v227, %v227
        %v234 = vmul.f32 %v228, %v228
        %v235 = vmul.f32 %v229, %v229
        %v236 = vmul.f32 %v230, %v230
        %v237 = vmul.f32 %v231, %v231
        %v238 = vmul.f32 %v232, %v232
        %v239 = vadd.f32 %v233, %v234
        %v240 = vadd.f32 %v239, %v235
        %v241 = vadd.f32 %v240, %v236
        %v242 = vadd.f32 %v241, %v237
        %v243 = vadd.f32 %v242, %v238
        %244 = vadd.xlane.f32.xlu0 %v243
        %v245 = vpop.xlane.xlu0 %244
        %v246 = vmul.f32 %v245, %v225
        %v247 = vadd.f32 %v246, 1e-05
        %v248 = vrsqrt.pop %v247
        %v249 = vmul.f32 %v227, %v248
        %v250 = vmul.f32 %v228, %v248
        %v251 = vmul.f32 %v229, %v248
        %v252 = vmul.f32 %v230, %v248
        %v253 = vmul.f32 %v231, %v248
        %v254 = vmul.f32 %v232, %v248
        %v255 = vld [vmem:[#allocation5] sm:$0x3f]
        %v257 = vlaneseq
        %v258 = vshrl.u32 %v257, 7
        %v259 = vsub.s32 0, %v258
        %v260 = vrot.slane %v255, %v259
        %v261 = vlaneseq
        %v262 = vshrl.u32 %v261, 7
        %v263 = vsub.s32 1, %v262
        %v264 = vrot.slane %v255, %v263
        %v265 = vlaneseq
        %v266 = vshrl.u32 %v265, 7
        %v267 = vsub.s32 2, %v266
        %v268 = vrot.slane %v255, %v267
        %v269 = vlaneseq
        %v270 = vshrl.u32 %v269, 7
        %v271 = vsub.s32 3, %v270
        %v272 = vrot.slane %v255, %v271
        %v273 = vlaneseq
        %v274 = vshrl.u32 %v273, 7
        %v275 = vsub.s32 4, %v274
        %v276 = vrot.slane %v255, %v275
        %v277 = vlaneseq
        %v278 = vshrl.u32 %v277, 7
        %v279 = vsub.s32 5, %v278
        %v280 = vrot.slane %v255, %v279
        %v287 = vmul.f32 %v249, %v260
        %v288 = vmul.f32 %v250, %v264
        %v289 = vmul.f32 %v251, %v268
        %v290 = vmul.f32 %v252, %v272
        %v291 = vmul.f32 %v253, %v276
        %v292 = vmul.f32 %v254, %v280
        %v293 = vld [vmem:[#allocation7] sm:$0x3f]
        %v295 = vlaneseq
        %v296 = vshrl.u32 %v295, 7
        %v297 = vsub.s32 0, %v296
        %v298 = vrot.slane %v293, %v297
        %v299 = vlaneseq
        %v300 = vshrl.u32 %v299, 7
        %v301 = vsub.s32 1, %v300
        %v302 = vrot.slane %v293, %v301
        %v303 = vlaneseq
        %v304 = vshrl.u32 %v303, 7
        %v305 = vsub.s32 2, %v304
        %v306 = vrot.slane %v293, %v305
        %v307 = vlaneseq
        %v308 = vshrl.u32 %v307, 7
        %v309 = vsub.s32 3, %v308
        %v310 = vrot.slane %v293, %v309
        %v311 = vlaneseq
        %v312 = vshrl.u32 %v311, 7
        %v313 = vsub.s32 4, %v312
        %v314 = vrot.slane %v293, %v313
        %v315 = vlaneseq
        %v316 = vshrl.u32 %v315, 7
        %v317 = vsub.s32 5, %v316
        %v318 = vrot.slane %v293, %v317
        %v325 = vadd.f32 %v287, %v298
        %v326 = vadd.f32 %v288, %v302
        %v327 = vadd.f32 %v289, %v306
        %v328 = vadd.f32 %v290, %v310
        %v329 = vadd.f32 %v291, %v314
        %v330 = vadd.f32 %v292, %v318
        %v331 = vpack.c.bf16 %v325, %v325
        %v332 = vpack.c.bf16 %v326, %v326
        %v333 = vpack.c.bf16 %v327, %v327
        %v334 = vpack.c.bf16 %v328, %v328
        %v335 = vpack.c.bf16 %v329, %v329
        %v336 = vpack.c.bf16 %v330, %v330
        %v343 = vunpack.c.l.b16 %v331
        %v344 = vunpack.c.l.b16 %v332
        %v345 = vunpack.c.l.b16 %v333
        %v346 = vunpack.c.l.b16 %v334
        %v347 = vunpack.c.l.b16 %v335
        %v348 = vunpack.c.l.b16 %v336
        %v349 = vpack.c.b16 %v344, %v343
        %v350 = vpack.c.b16 %v346, %v345
        %v351 = vpack.c.b16 %v348, %v347
        %355 = vst [vmem:[%s211] sm:$0xff] %v349
        %356 = vst [vmem:[%s211 + $0x8] sm:$0xff] %v350
        %357 = vst [vmem:[%s211 + $0x10] sm:$0xff] %v351
        %s358 = sand.u32 %s97, 1
        %s359 = scalar_lea.sflag [#allocation4], %s358
        %s360 = sand.u32 %s97, 1
        %s361 = smul.addr %s360, 24
        %s362 = scalar_lea.vmem [#allocation8], %s361
        // Predicated region
        $region45: #{tpu_custom_call.1} parent=31 // pred_check
          %p363 = pneg %p107
        $region46: #{tpu_custom_call.1} parent=31 // pred_check_branch
          %365 = sbr.rel (%p363) target = $region48
        $region47: #{tpu_custom_call.1} parent=31 // pred_region
          %s367 = ssub.s32 384, 384
          %368 = vsyncadd %s359, %s367
          %s369 = smul.addr %s21, 6
          %s370 = smul.addr %s369, 64
          %s371 = scalar_lea.hbm %s3, %s370
          %s373 = sshll.u32 %s362, 4
          %s374 = int_to_ptr.vmem [resolvable:$true] %s373
          %376 = dma.vmem_to_hbm [thread:$0]  %s374, 384, %s371, %s359
        $region48: #{tpu_custom_call.1} parent=31 // pred_fallthru
          _
      $region32: #{tpu_custom_call.1} parent=5 // pred_fallthru
        _
      %p377 = scmp.le.s32.totalorder 2, %s16
      // Predicated region
      $region49: #{tpu_custom_call.1} parent=5 // pred_check
        %p378 = pneg %p377
      $region50: #{tpu_custom_call.1} parent=5 // pred_check_branch
        %380 = sbr.rel (%p378) target = $region52
      $region51: #{tpu_custom_call.1} parent=5 // pred_region
        %s381 = ssub.s32 %s16, 2
        // Predicated region
        $region53: #{tpu_custom_call.1} parent=51 // pred_check
          %p382 = pneg %p113
        $region54: #{tpu_custom_call.1} parent=51 // pred_check_branch
          %384 = sbr.rel (%p382) target = $region56
        $region55: #{tpu_custom_call.1} parent=51 // pred_region
          %s385 = sand.u32 %s98, 1
          %s386 = scalar_lea.sflag [#allocation4], %s385
          %s387 = sand.u32 %s98, 1
          %s388 = smul.addr %s387, 24
          %s389 = scalar_lea.vmem [#allocation8], %s388
          %390 = dma.done %s386, 384
        $region56: #{tpu_custom_call.1} parent=51 // pred_fallthru
          _
      $region52: #{tpu_custom_call.1} parent=5 // pred_fallthru
        _
    $region6: #{tpu_custom_call.1} parent=1 // loop_footer
      %s20 = sadd.s32 1, %s16
    $region7: #{tpu_custom_call.1} parent=1 // loop_footer_branch
      %15 = sbr.rel target = $region3
    $region8: #{tpu_custom_call.1} parent=1 // loop_exit
      _
    %391 = vsyncpa [#allocation3], 1
    %s392 = scalar_lea.sflag [#allocation3], 1
    %393 = vsyncpa %s392, 1
    %394 = vsyncpa [#allocation6], 1
    %395 = vsyncpa [#allocation4], 1
    %s396 = scalar_lea.sflag [#allocation4], 1
    %397 = vsyncpa %s396, 1

</llo_original>
